<compile_context>
chip_gen: v7x
topology: tpu7x:2x2x1
jax: 0.10.0
libtpu: 0.0.40
codegen_flags: <defaults>
</compile_context>

<pallas_src>
import functools

import jax
import jax.numpy as jnp
from jax.experimental import pallas as pl
from jax.experimental.pallas import tpu as pltpu

LANE = 128
SUBLANE = 8
MAX_TIME_CHUNK = 16


def _round_up(x, m):
    return (x + m - 1) // m * m


def _pick_time_chunk(T, max_chunk=MAX_TIME_CHUNK):
    """Largest divisor of T that is <= max_chunk (>= 1)."""
    tc = 1
    for c in range(1, min(T, max_chunk) + 1):
        if T % c == 0:
            tc = c
    return tc


# ---------------------------------------------------------------------------
# Kernels
# ---------------------------------------------------------------------------
def rnn_cell_kernel(x_ref, h_ref, wx_ref, wh_ref, b_ref, slab_ref):
    # x_ref : [B, I]        wx_ref : [I,   HOp]
    # h_ref : [B, HOp]      wh_ref : [HOp, HOp]   (rows >= H are zero)
    # b_ref : [1, HOp]      slab_ref: [B, HOp]  = [ hidden' | output | pad ]
    slab_ref[...] = (
        jnp.dot(x_ref[...], wx_ref[...], preferred_element_type=jnp.float32)
        + jnp.dot(h_ref[...], wh_ref[...], preferred_element_type=jnp.float32)
        + b_ref[...]
    )


def rnn_seq_kernel(x_ref, h0_ref, wx_ref, wh_ref, b_ref,
                   slab_ref, hfin_ref, h_scr):
    # One grid step processes Tc timesteps.
    # x_ref   : [Tc, Bp, I]    streamed input chunk
    # h0_ref  : [Bp, HOp]      resident (constant index_map)
    # wx_ref  : [I, HOp]       resident
    # wh_ref  : [HOp, HOp]     resident (rows >= H zero)
    # b_ref   : [1, HOp]       resident
    # slab_ref: [Tc, Bp, HOp]  streamed output chunk (hidden|output|pad)
    # hfin_ref: [Bp, HOp]      final hidden slab (written on last grid step)
    # h_scr   : [Bp, HOp]      VMEM-carried hidden state
    g = pl.program_id(0)

    @pl.when(g == 0)
    def _():
        h_scr[...] = h0_ref[...]

    Tc, Bp, I = x_ref.shape
    HOp = wh_ref.shape[1]

    # Chunk-level input projection: one matmul with M = Tc*Bp rows, hoisted
    # off the serial per-timestep path.
    xproj = (
        jnp.dot(x_ref[...].reshape(Tc * Bp, I), wx_ref[...],
                preferred_element_type=jnp.float32)
        + b_ref[...]
    ).reshape(Tc, Bp, HOp)

    # Serial recurrence: one 128-lane dot + one VPU add per timestep.
    # Static Python loop == fully unrolled (Tc is a small static int), all
    # slices/stores use static indices.
    h = h_scr[...]
    for t in range(Tc):
        h = xproj[t] + jnp.dot(h, wh_ref[...],
                               preferred_element_type=jnp.float32)
        slab_ref[t] = h
    h_scr[...] = h

    @pl.when(g == pl.num_programs(0) - 1)
    def _():
        hfin_ref[...] = h


# ---------------------------------------------------------------------------
# One-time parameter preparation (hoisted out of the per-step path)
# ---------------------------------------------------------------------------
def prepare_params(w_i2h, b_i2h, w_i2o, b_i2o):
    """w_i2h: [H, I+H], w_i2o: [O, I+H]  (PyTorch Linear layout).
    Returns fused, transposed, lane-padded weights for the kernels."""
    H, C = w_i2h.shape
    O = w_i2o.shape[0]
    I = C - H
    HOp = _round_up(H + O, LANE)

    # Fused transposed weight [C, H+O] -> pad columns to a lane-dense HOp.
    w_fused_t = jnp.concatenate([w_i2h.T, w_i2o.T], axis=1)           # [C, H+O]
    w_fused_t = jnp.pad(w_fused_t, ((0, 0), (0, HOp - (H + O))))      # [C, HOp]

    wx = w_fused_t[:I]                                                # [I, HOp]
    # Pad hidden-weight rows to HOp so the padded slab can be carried as the
    # recurrent state (rows beyond H are exactly zero -> no contribution).
    wh = jnp.pad(w_fused_t[I:], ((0, HOp - H), (0, 0)))               # [HOp, HOp]

    b = jnp.pad(jnp.concatenate([b_i2h, b_i2o]),
                (0, HOp - (H + O))).reshape(1, HOp)                   # [1, HOp]
    return wx, wh, b


# ---------------------------------------------------------------------------
# Wrappers
# ---------------------------------------------------------------------------
def rnn_cell_step(x, h_slab, wx, wh, b):
    """One cell step carrying the lane-padded slab [B, HOp] as hidden state.
    The returned slab ([hidden'|output|pad]) can be fed straight back as
    h_slab for the next step (wh rows >= H are zero), so a host-side loop
    needs no per-step pad/slice glue."""
    B = x.shape[0]
    HOp = wx.shape[1]
    return pl.pallas_call(
        rnn_cell_kernel,
        out_shape=jax.ShapeDtypeStruct((B, HOp), jnp.float32),
    )(x, h_slab, wx, wh, b)


@functools.partial(jax.jit, static_argnames=("hidden_size", "output_size"))
def rnn_forward(x, h, wx, wh, b, *, hidden_size, output_size):
    """Single cell step, matching RNN.forward: returns (output, hidden)."""
    HOp = wx.shape[1]
    h_slab = jnp.pad(h, ((0, 0), (0, HOp - h.shape[1])))
    slab = rnn_cell_step(x, h_slab, wx, wh, b)
    output = slab[:, hidden_size:hidden_size + output_size]
    hidden = slab[:, :hidden_size]
    return output, hidden


@functools.partial(jax.jit, static_argnames=("hidden_size", "output_size"))
def rnn_forward_sequence(x_seq, h0, wx, wh, b, *, hidden_size, output_size):
    """Applies the cell over x_seq [T, B, I] with the time loop inside one
    pallas_call (weights resident in VMEM, hidden carried in VMEM scratch,
    Tc timesteps per grid step).  Returns (outputs [T, B, O], final_hidden)."""
    T, B, I = x_seq.shape
    H = h0.shape[1]
    HOp = wx.shape[1]

    Bp = _round_up(B, SUBLANE)                 # fill sublanes / MXU rows
    Tc = _pick_time_chunk(T)                   # timesteps per grid step

    x_pad = jnp.pad(x_seq, ((0, 0), (0, Bp - B), (0, 0))) if Bp != B else x_seq
    h0_pad = jnp.pad(h0, ((0, Bp - B), (0, HOp - H)))

    slab_seq, h_fin = pl.pallas_call(
        rnn_seq_kernel,
        grid=(T // Tc,),
        in_specs=[
            pl.BlockSpec((Tc, Bp, I), lambda g: (g, 0, 0)),   # x chunk (streamed)
            pl.BlockSpec((Bp, HOp), lambda g: (0, 0)),        # h0   (resident)
            pl.BlockSpec((I, HOp), lambda g: (0, 0)),         # wx   (resident)
            pl.BlockSpec((HOp, HOp), lambda g: (0, 0)),       # wh   (resident)
            pl.BlockSpec((1, HOp), lambda g: (0, 0)),         # bias (resident)
        ],
        out_specs=[
            pl.BlockSpec((Tc, Bp, HOp), lambda g: (g, 0, 0)),  # slabs (streamed)
            pl.BlockSpec((Bp, HOp), lambda g: (0, 0)),         # final hidden
        ],
        out_shape=(
            jax.ShapeDtypeStruct((T, Bp, HOp), jnp.float32),
            jax.ShapeDtypeStruct((Bp, HOp), jnp.float32),
        ),
        scratch_shapes=[pltpu.VMEM((Bp, HOp), jnp.float32)],
        compiler_params=pltpu.CompilerParams(
            dimension_semantics=("arbitrary",)),               # serial time axis
    )(x_pad, h0_pad, wx, wh, b)

    outputs = slab_seq[:, :B, hidden_size:hidden_size + output_size]
    final_hidden = h_fin[:B, :hidden_size]
    return outputs, final_hidden


# ---------------------------------------------------------------------------
if __name__ == "__main__":
    batch = 2
    input_size = 16
    hidden_size = 32
    output_size = 8
    seq_len = 8

    key = jax.random.PRNGKey(0)
    k1, k2, k3, k4, k5, k6 = jax.random.split(key, 6)

    fan_in = input_size + hidden_size
    bound = 1.0 / jnp.sqrt(fan_in)
    w_i2h = jax.random.uniform(k1, (hidden_size, fan_in), jnp.float32, -bound, bound)
    b_i2h = jax.random.uniform(k2, (hidden_size,), jnp.float32, -bound, bound)
    w_i2o = jax.random.uniform(k3, (output_size, fan_in), jnp.float32, -bound, bound)
    b_i2o = jax.random.uniform(k4, (output_size,), jnp.float32, -bound, bound)

    x = jax.random.normal(k5, (batch, input_size), jnp.float32)
    x_seq = jax.random.normal(k6, (seq_len, batch, input_size), jnp.float32)
    h0 = jnp.zeros((batch, hidden_size), jnp.float32)     # initHidden()

    wx, wh, b = prepare_params(w_i2h, b_i2h, w_i2o, b_i2o)
    wx, wh, b = jax.block_until_ready((wx, wh, b))         # one-time prep

    # ---- single-step cell (exact module forward) ----
    output, hidden = rnn_forward(x, h0, wx, wh, b,
                                 hidden_size=hidden_size,
                                 output_size=output_size)
    jax.block_until_ready((output, hidden))

    combined = jnp.concatenate([x, h0], axis=1)
    ref_hidden = combined @ w_i2h.T + b_i2h
    ref_output = combined @ w_i2o.T + b_i2o
    assert jnp.allclose(output, ref_output, rtol=1e-4, atol=1e-4), "output mismatch"
    assert jnp.allclose(hidden, ref_hidden, rtol=1e-4, atol=1e-4), "hidden mismatch"

    # ---- multi-step (time loop inside the kernel, same cell semantics) ----
    outputs_seq, h_final = rnn_forward_sequence(x_seq, h0, wx, wh, b,
                                                hidden_size=hidden_size,
                                                output_size=output_size)
    jax.block_until_ready((outputs_seq, h_final))

    h_ref = h0
    ref_outs = []
    for t in range(seq_len):
        c = jnp.concatenate([x_seq[t], h_ref], axis=1)
        o_t = c @ w_i2o.T + b_i2o
        h_ref = c @ w_i2h.T + b_i2h
        ref_outs.append(o_t)
    ref_outs = jnp.stack(ref_outs, axis=0)
    assert jnp.allclose(outputs_seq, ref_outs, rtol=1e-3, atol=1e-4), "seq output mismatch"
    assert jnp.allclose(h_final, h_ref, rtol=1e-3, atol=1e-4), "seq hidden mismatch"

    print("KERNEL_OK")
</pallas_src>

<mosaic_0001>
module attributes {stable_mosaic.version = 11 : i64} {
  func.func @rnn_cell_kernel(%arg0: memref<2x16xf32, #tpu.memory_space<vmem>>, %arg1: memref<2x128xf32, #tpu.memory_space<vmem>>, %arg2: memref<16x128xf32, #tpu.memory_space<vmem>>, %arg3: memref<128x128xf32, #tpu.memory_space<vmem>>, %arg4: memref<1x128xf32, #tpu.memory_space<vmem>>, %arg5: memref<2x128xf32, #tpu.memory_space<vmem>>) attributes {dimension_semantics = [], scalar_prefetch = 0 : i64, scratch_operands = 0 : i64, tpu.core_type = #tpu.core_type<tc>} {
    %c0 = arith.constant 0 : index
    %c0_0 = arith.constant 0 : index
    %0 = vector.load %arg0[%c0, %c0_0] : memref<2x16xf32, #tpu.memory_space<vmem>>, vector<2x16xf32>
    %c0_1 = arith.constant 0 : index
    %c0_2 = arith.constant 0 : index
    %1 = vector.load %arg2[%c0_1, %c0_2] : memref<16x128xf32, #tpu.memory_space<vmem>>, vector<16x128xf32>
    %cst = arith.constant dense<0.000000e+00> : vector<2x128xf32>
    %2 = tpu.matmul %0, %1, %cst {dimension_numbers = #tpu.dot_dimension_numbers<[1], [0], [0], [1], [0, 0, 1, 1], [], []>} : vector<2x16xf32>, vector<16x128xf32>, vector<2x128xf32> -> vector<2x128xf32>
    %c0_3 = arith.constant 0 : index
    %c0_4 = arith.constant 0 : index
    %3 = vector.load %arg1[%c0_3, %c0_4] : memref<2x128xf32, #tpu.memory_space<vmem>>, vector<2x128xf32>
    %c0_5 = arith.constant 0 : index
    %c0_6 = arith.constant 0 : index
    %4 = vector.load %arg3[%c0_5, %c0_6] : memref<128x128xf32, #tpu.memory_space<vmem>>, vector<128x128xf32>
    %cst_7 = arith.constant dense<0.000000e+00> : vector<2x128xf32>
    %5 = tpu.matmul %3, %4, %cst_7 {dimension_numbers = #tpu.dot_dimension_numbers<[1], [0], [0], [1], [0, 0, 1, 1], [], []>} : vector<2x128xf32>, vector<128x128xf32>, vector<2x128xf32> -> vector<2x128xf32>
    %6 = arith.addf %2, %5 : vector<2x128xf32>
    %c0_8 = arith.constant 0 : index
    %c0_9 = arith.constant 0 : index
    %7 = vector.load %arg4[%c0_8, %c0_9] : memref<1x128xf32, #tpu.memory_space<vmem>>, vector<1x128xf32>
    %8 = vector.broadcast %7 : vector<1x128xf32> to vector<2x128xf32>
    %9 = arith.addf %6, %8 : vector<2x128xf32>
    %c0_10 = arith.constant 0 : index
    %c0_11 = arith.constant 0 : index
    %10 = vector.load %arg5[%c0_10, %c0_11] : memref<2x128xf32, #tpu.memory_space<vmem>>, vector<2x128xf32>
    tpu.vector_store %arg5[%c0_10, %c0_11], %9 {strides = array<i32>} : memref<2x128xf32, #tpu.memory_space<vmem>>, vector<2x128xf32>,
    return
  }
}

</mosaic_0001>

<llo_original>
// kernel: rnn_forward.1
$region0: #{rnn_forward.1}
  #allocation0 [shape = 'u32[]', space=smem, size = 0x4, offset = 0x4, fixed_abs, tag = 'smem constant byte address 0x4 - core index']
  #allocation1 [shape = 'u32[144,128]{1,0:T(1,128)}', space=vmem, size = 0x12000, scoped, tag = 'internal scratch']
  %s0 = inlined_call_operand.vmem [shape: f32[2,16], index: 0, kind: input, shape index: {}]
  %s1 = inlined_call_operand.vmem [shape: f32[2,128], index: 1, kind: input, shape index: {}]
  %s2 = inlined_call_operand.hbm [shape: f32[16,128], index: 2, kind: input, shape index: {}]
  %s3 = inlined_call_operand.hbm [shape: f32[128,128], index: 3, kind: input, shape index: {}]
  %s4 = inlined_call_operand.vmem [shape: f32[1,128], index: 4, kind: input, shape index: {}]
  %s5 = inlined_call_operand.vmem [shape: f32[2,128], index: 5, kind: output, shape index: {}]
  %s6 = sld [smem:[#allocation0]]
  $region38: #{rnn_forward.1} parent=0
    _
  %s8 = ssub.s32 1, %s6
  %s9 = scalar_select 0, %s8, %s6
  $region1: #{rnn_forward.1} parent=0
    #allocation2 [shape = 'u8[8192]{0}', space=vmem, size = 0x2000, scoped, tag = 'input window, operand 2, single buffered']
    #allocation3 [shape = 's32[1]{0}', space=sflag, size = 0x4, scoped, tag = 'scoped memory for rnn_forward.1']
    #allocation4 [shape = 'u8[65536]{0}', space=vmem, size = 0x10000, scoped, tag = 'input window, operand 3, single buffered']
    #allocation5 [shape = 's32[1]{0}', space=sflag, size = 0x4, scoped, tag = 'scoped memory for rnn_forward.1']
    %10 = vsyncpa [#allocation3], 0
    %11 = vsyncpa [#allocation5], 0
    // Predicated region
    $region2: #{rnn_forward.1} parent=1 // pred_check
      _
    $region3: #{rnn_forward.1} parent=1 // pred_check_branch
      %13 = sbr.rel (0) target = $region5
    $region4: #{rnn_forward.1} parent=1 // pred_region
      _
    $region5: #{rnn_forward.1} parent=1 // pred_fallthru
      _
    // Predicated region
    $region6: #{rnn_forward.1} parent=1 // pred_check
      _
    $region7: #{rnn_forward.1} parent=1 // pred_check_branch
      %15 = sbr.rel (0) target = $region9
    $region8: #{rnn_forward.1} parent=1 // pred_region
      _
    $region9: #{rnn_forward.1} parent=1 // pred_fallthru
      _
    // Predicated region
    $region10: #{rnn_forward.1} parent=1 // pred_check
      _
    $region11: #{rnn_forward.1} parent=1 // pred_check_branch
      %17 = sbr.rel (0) target = $region13
    $region12: #{rnn_forward.1} parent=1 // pred_region
      %s19 = ssub.s32 256, 256
      %20 = vsyncadd [#allocation3], %s19
      %s21 = sshll.u32 [#allocation2], 4
      %s22 = int_to_ptr.vmem [resolvable:$true] %s21
      %27 = dma.hbm_to_vmem [thread:$0]  %s2, 256, %s22, [#allocation3], 128, 128, 8
    $region13: #{rnn_forward.1} parent=1 // pred_fallthru
      _
    // Predicated region
    $region14: #{rnn_forward.1} parent=1 // pred_check
      _
    $region15: #{rnn_forward.1} parent=1 // pred_check_branch
      %29 = sbr.rel (0) target = $region17
    $region16: #{rnn_forward.1} parent=1 // pred_region
      %s31 = ssub.s32 2048, 2048
      %32 = vsyncadd [#allocation5], %s31
      %s33 = sshll.u32 [#allocation4], 4
      %s34 = int_to_ptr.vmem [resolvable:$true] %s33
      %39 = dma.hbm_to_vmem [thread:$0]  %s3, 2048, %s34, [#allocation5], 128, 128, 8
    $region17: #{rnn_forward.1} parent=1 // pred_fallthru
      _
    // Predicated region
    $region18: #{rnn_forward.1} parent=1 // pred_check
      _
    $region19: #{rnn_forward.1} parent=1 // pred_check_branch
      %41 = sbr.rel (0) target = $region21
    $region20: #{rnn_forward.1} parent=1 // pred_region
      _
    $region21: #{rnn_forward.1} parent=1 // pred_fallthru
      _
    // Predicated region
    $region22: #{rnn_forward.1} parent=1 // pred_check
      _
    $region23: #{rnn_forward.1} parent=1 // pred_check_branch
      %43 = sbr.rel (0) target = $region25
    $region24: #{rnn_forward.1} parent=1 // pred_region
      %44 = dma.done [#allocation3], 256
    $region25: #{rnn_forward.1} parent=1 // pred_fallthru
      _
    // Predicated region
    $region26: #{rnn_forward.1} parent=1 // pred_check
      _
    $region27: #{rnn_forward.1} parent=1 // pred_check_branch
      %46 = sbr.rel (0) target = $region29
    $region28: #{rnn_forward.1} parent=1 // pred_region
      %47 = dma.done [#allocation5], 2048
    $region29: #{rnn_forward.1} parent=1 // pred_fallthru
      _
    %v48 = vld [vmem:[%s0] sm:$0x3]
    %v49 = vld [vmem:[#allocation2] sm:$0xff]
    %v50 = vld [vmem:[#allocation2 + $0x8] sm:$0xff]
    %v51 = vld [vmem:[%s1] sm:$0x3]
    %v52 = vld [vmem:[#allocation4] sm:$0xff]
    %v53 = vld [vmem:[#allocation4 + $0x8] sm:$0xff]
    %v54 = vld [vmem:[#allocation4 + $0x10] sm:$0xff]
    %v55 = vld [vmem:[#allocation4 + $0x18] sm:$0xff]
    %v56 = vld [vmem:[#allocation4 + $0x20] sm:$0xff]
    %v57 = vld [vmem:[#allocation4 + $0x28] sm:$0xff]
    %v58 = vld [vmem:[#allocation4 + $0x30] sm:$0xff]
    %v59 = vld [vmem:[#allocation4 + $0x38] sm:$0xff]
    %v60 = vld [vmem:[#allocation4 + $0x40] sm:$0xff]
    %v61 = vld [vmem:[#allocation4 + $0x48] sm:$0xff]
    %v62 = vld [vmem:[#allocation4 + $0x50] sm:$0xff]
    %v63 = vld [vmem:[#allocation4 + $0x58] sm:$0xff]
    %v64 = vld [vmem:[#allocation4 + $0x60] sm:$0xff]
    %v65 = vld [vmem:[#allocation4 + $0x68] sm:$0xff]
    %v66 = vld [vmem:[#allocation4 + $0x70] sm:$0xff]
    %v67 = vld [vmem:[#allocation4 + $0x78] sm:$0xff]
    %68 = vmatprep.subr.mxu0 0.0
    %69 = vmatpush1.msra.mxu0 %v52
    %70 = vmatprep.subr.mxu0 0.0
    %71 = vmatpush1.msra.mxu0 %v53
    %72 = vmatprep.subr.mxu0 0.0
    %73 = vmatpush1.msra.mxu0 %v54
    %74 = vmatprep.subr.mxu0 0.0
    %75 = vmatpush1.msra.mxu0 %v55
    %76 = vmatprep.subr.mxu0 0.0
    %77 = vmatpush1.msra.mxu0 %v56
    %78 = vmatprep.subr.mxu0 0.0
    %79 = vmatpush1.msra.mxu0 %v57
    %80 = vmatprep.subr.mxu0 0.0
    %81 = vmatpush1.msra.mxu0 %v58
    %82 = vmatprep.subr.mxu0 0.0
    %83 = vmatpush1.msra.mxu0 %v59
    %84 = vmatprep.subr.mxu0 0.0
    %85 = vmatpush1.msra.mxu0 %v60
    %86 = vmatprep.subr.mxu0 0.0
    %87 = vmatpush1.msra.mxu0 %v61
    %88 = vmatprep.subr.mxu0 0.0
    %89 = vmatpush1.msra.mxu0 %v62
    %90 = vmatprep.subr.mxu0 0.0
    %91 = vmatpush1.msra.mxu0 %v63
    %92 = vmatprep.subr.mxu0 0.0
    %93 = vmatpush1.msra.mxu0 %v64
    %94 = vmatprep.subr.mxu0 0.0
    %95 = vmatpush1.msra.mxu0 %v65
    %96 = vmatprep.subr.mxu0 0.0
    %97 = vmatpush1.msra.mxu0 %v66
    %98 = vmatprep.subr.mxu0 0.0
    %99 = vmatpush1.msra.mxu0 %v67
    %100 = vmatprep.subr.mxu0 0.0
    %101 = vmatpush1.msra.mxu0 0.0
    %102 = vmatprep.subr.mxu0 0.0
    %103 = vmatpush1.msra.mxu0 0.0
    %104 = vmatprep.subr.mxu0 0.0
    %105 = vmatpush1.msra.mxu0 0.0
    %106 = vmatprep.subr.mxu0 0.0
    %107 = vmatpush1.msra.mxu0 0.0
    %108 = vmatprep.subr.mxu0 0.0
    %109 = vmatpush1.msra.mxu0 0.0
    %110 = vmatprep.subr.mxu0 0.0
    %111 = vmatpush1.msra.mxu0 0.0
    %112 = vmatprep.subr.mxu0 0.0
    %113 = vmatpush1.msra.mxu0 0.0
    %114 = vmatprep.subr.mxu0 0.0
    %115 = vmatpush1.msra.mxu0 0.0
    %116 = vmatprep.subr.mxu0 0.0
    %117 = vmatpush1.msra.mxu0 0.0
    %118 = vmatprep.subr.mxu0 0.0
    %119 = vmatpush1.msra.mxu0 0.0
    %120 = vmatprep.subr.mxu0 0.0
    %121 = vmatpush1.msra.mxu0 0.0
    %122 = vmatprep.subr.mxu0 0.0
    %123 = vmatpush1.msra.mxu0 0.0
    %124 = vmatprep.subr.mxu0 0.0
    %125 = vmatpush1.msra.mxu0 0.0
    %126 = vmatprep.subr.mxu0 0.0
    %127 = vmatpush1.msra.mxu0 0.0
    %128 = vmatprep.subr.mxu0 0.0
    %129 = vmatpush1.msra.mxu0 0.0
    %130 = vmatprep.subr.mxu0 0.0
    %131 = vmatpush1.msra.mxu0 0.0
    %132 = vmatprep.mubr.f32.mxu0 0.0
    %133 = vmatmul.mubr.f32.gmra.mrb[0].mxu0 %v51
    %v134 = vpop.f32.mrb[0].mxu0
    %v135 = vadd.f32 0.0, %v134
    %v136 = vpop.f32.mrb[0].mxu0
    %137 = vdwg.mxu0
    %vm138 = vcmask 130048
    %v140 = vsel %vm138, %v48, 0
    %142 = vmatprep.subr.mxu0 0.0
    %143 = vmatpush1.msra.mxu0 %v49
    %144 = vmatprep.subr.mxu0 0.0
    %145 = vmatpush1.msra.mxu0 %v50
    %146 = vmatprep.subr.mxu0 0.0
    %147 = vmatpush1.msra.mxu0 0.0
    %148 = vmatprep.subr.mxu0 0.0
    %149 = vmatpush1.msra.mxu0 0.0
    %150 = vmatprep.subr.mxu0 0.0
    %151 = vmatpush1.msra.mxu0 0.0
    %152 = vmatprep.subr.mxu0 0.0
    %153 = vmatpush1.msra.mxu0 0.0
    %154 = vmatprep.subr.mxu0 0.0
    %155 = vmatpush1.msra.mxu0 0.0
    %156 = vmatprep.subr.mxu0 0.0
    %157 = vmatpush1.msra.mxu0 0.0
    %158 = vmatprep.subr.mxu0 0.0
    %159 = vmatpush1.msra.mxu0 0.0
    %160 = vmatprep.subr.mxu0 0.0
    %161 = vmatpush1.msra.mxu0 0.0
    %162 = vmatprep.subr.mxu0 0.0
    %163 = vmatpush1.msra.mxu0 0.0
    %164 = vmatprep.subr.mxu0 0.0
    %165 = vmatpush1.msra.mxu0 0.0
    %166 = vmatprep.subr.mxu0 0.0
    %167 = vmatpush1.msra.mxu0 0.0
    %168 = vmatprep.subr.mxu0 0.0
    %169 = vmatpush1.msra.mxu0 0.0
    %170 = vmatprep.subr.mxu0 0.0
    %171 = vmatpush1.msra.mxu0 0.0
    %172 = vmatprep.subr.mxu0 0.0
    %173 = vmatpush1.msra.mxu0 0.0
    %174 = vmatprep.subr.mxu0 0.0
    %175 = vmatpush1.msra.mxu0 0.0
    %176 = vmatprep.subr.mxu0 0.0
    %177 = vmatpush1.msra.mxu0 0.0
    %178 = vmatprep.subr.mxu0 0.0
    %179 = vmatpush1.msra.mxu0 0.0
    %180 = vmatprep.subr.mxu0 0.0
    %181 = vmatpush1.msra.mxu0 0.0
    %182 = vmatprep.subr.mxu0 0.0
    %183 = vmatpush1.msra.mxu0 0.0
    %184 = vmatprep.subr.mxu0 0.0
    %185 = vmatpush1.msra.mxu0 0.0
    %186 = vmatprep.subr.mxu0 0.0
    %187 = vmatpush1.msra.mxu0 0.0
    %188 = vmatprep.subr.mxu0 0.0
    %189 = vmatpush1.msra.mxu0 0.0
    %190 = vmatprep.subr.mxu0 0.0
    %191 = vmatpush1.msra.mxu0 0.0
    %192 = vmatprep.subr.mxu0 0.0
    %193 = vmatpush1.msra.mxu0 0.0
    %194 = vmatprep.subr.mxu0 0.0
    %195 = vmatpush1.msra.mxu0 0.0
    %196 = vmatprep.subr.mxu0 0.0
    %197 = vmatpush1.msra.mxu0 0.0
    %198 = vmatprep.subr.mxu0 0.0
    %199 = vmatpush1.msra.mxu0 0.0
    %200 = vmatprep.subr.mxu0 0.0
    %201 = vmatpush1.msra.mxu0 0.0
    %202 = vmatprep.subr.mxu0 0.0
    %203 = vmatpush1.msra.mxu0 0.0
    %204 = vmatprep.subr.mxu0 0.0
    %205 = vmatpush1.msra.mxu0 0.0
    %206 = vmatprep.mubr.f32.mxu0 0.0
    %207 = vmatmul.mubr.f32.gmra.mrb[0].mxu0 %v140
    %v208 = vpop.f32.mrb[0].mxu0
    %v209 = vadd.f32 %v135, %v208
    %v210 = vpop.f32.mrb[0].mxu0
    %211 = vdwg.mxu0
    %v212 = vld [vmem:[%s4] sm:$0x1]
    %v214 = vlaneseq
    %v215 = vshrl.u32 %v214, 7
    %v216 = vsub.s32 0, %v215
    %v217 = vrot.slane %v212, %v216
    %v219 = vadd.f32 %v209, %v217
    %220 = vst [vmem:[%s5] sm:$0x3] %v219
    // Predicated region
    $region30: #{rnn_forward.1} parent=1 // pred_check
      _
    $region31: #{rnn_forward.1} parent=1 // pred_check_branch
      %222 = sbr.rel (0) target = $region33
    $region32: #{rnn_forward.1} parent=1 // pred_region
      _
    $region33: #{rnn_forward.1} parent=1 // pred_fallthru
      _
    // Predicated region
    $region34: #{rnn_forward.1} parent=1 // pred_check
      _
    $region35: #{rnn_forward.1} parent=1 // pred_check_branch
      %224 = sbr.rel (0) target = $region37
    $region36: #{rnn_forward.1} parent=1 // pred_region
      _
    $region37: #{rnn_forward.1} parent=1 // pred_fallthru
      _
    %225 = vsyncpa [#allocation3], 1
    %226 = vsyncpa [#allocation5], 1

</llo_original>
